<compile_context>
chip_gen: v7x
topology: tpu7x:2x2x1
jax: 0.10.0
libtpu: 0.0.40
codegen_flags: <defaults>
</compile_context>

<pallas_src>
import functools

import jax
import jax.numpy as jnp
from jax.experimental import pallas as pl
from jax.experimental.pallas import tpu as pltpu

LANE = 128  # vreg lane width


def _round_up(n, m):
    return ((n + m - 1) // m) * m


# ---------------------------------------------------------------------------
# Kernel: lin1 -> tanh -> lin2 -> tanh -> lin3 -> softmax, one batch tile per step
# ---------------------------------------------------------------------------
def _mlp_kernel(x_ref, w1_ref, b1_ref, w2_ref, b2_ref, w3_ref, b3_ref, o_ref,
                *, exact_softmax):
    w1 = w1_ref[...]
    x = x_ref[...].astype(w1.dtype)          # dtype cast fused into the kernel (no wrapper pass)

    # ---- lin1 + tanh (MXU in weight dtype, f32 accumulate, f32 tanh) ----
    h1 = jnp.tanh(jnp.dot(x, w1, preferred_element_type=jnp.float32) + b1_ref[...])
    # TODO(synk): nn.Dropout is identity at inference; training-mode dropout not implemented.

    # ---- lin2 + tanh ----
    w2 = w2_ref[...]
    h2 = jnp.tanh(jnp.dot(h1.astype(w2.dtype), w2,
                          preferred_element_type=jnp.float32) + b2_ref[...])

    # ---- lin3 (real 64 output classes, no padded columns -> no masking needed) ----
    w3 = w3_ref[...]
    logits = jnp.dot(h2.astype(w3.dtype), w3,
                     preferred_element_type=jnp.float32) + b3_ref[...]

    # ---- softmax over the 64 classes ----
    m = jnp.max(logits, axis=-1, keepdims=True)
    e = jnp.exp(logits - m)
    denom = jnp.sum(e, axis=-1, keepdims=True)
    if exact_softmax:
        probs = e / denom                                   # exact: bit-tight f32 parity
    else:
        probs = e * pl.reciprocal(denom, approx=True)       # EUP slot, perf path only
    o_ref[...] = probs.astype(o_ref.dtype)


def _mlp_pallas(x, w1, b1, w2, b2, w3, b3, *, tb, exact_softmax):
    b_pad, f = x.shape
    out_dim = w3.shape[1]
    grid = (b_pad // tb,)
    const = lambda i: (0, 0)                 # weights/biases VMEM-resident across all tiles

    return pl.pallas_call(
        functools.partial(_mlp_kernel, exact_softmax=exact_softmax),
        out_shape=jax.ShapeDtypeStruct((b_pad, out_dim), jnp.float32),
        grid=grid,
        in_specs=[
            pl.BlockSpec((tb, f), lambda i: (i, 0)),   # activation tile (last dim == full array)
            pl.BlockSpec(w1.shape, const),
            pl.BlockSpec(b1.shape, const),
            pl.BlockSpec(w2.shape, const),
            pl.BlockSpec(b2.shape, const),
            pl.BlockSpec(w3.shape, const),
            pl.BlockSpec(b3.shape, const),
        ],
        out_specs=pl.BlockSpec((tb, out_dim), lambda i: (i, 0)),
        compiler_params=pltpu.CompilerParams(
            dimension_semantics=("parallel",),          # megacore split on v7x
        ),
    )(x, w1, b1, w2, b2, w3, b3)


# ---------------------------------------------------------------------------
# Parameter construction (deterministic, mirrors nn.Linear shapes; W stored (in, out))
# ---------------------------------------------------------------------------
def init_mlp_params(key, board_size, nodes_first, nodes_second, out_dim=64):
    in_dim = board_size * board_size
    ks = jax.random.split(key, 6)

    def linear(kw, kb, fan_in, fan_out):
        bound = 1.0 / jnp.sqrt(fan_in)
        w = jax.random.uniform(kw, (fan_in, fan_out), jnp.float32, -bound, bound)
        b = jax.random.uniform(kb, (1, fan_out), jnp.float32, -bound, bound)
        return w, b

    w1, b1 = linear(ks[0], ks[1], in_dim, nodes_first)
    w2, b2 = linear(ks[2], ks[3], nodes_first, nodes_second)
    w3, b3 = linear(ks[4], ks[5], nodes_second, out_dim)
    return dict(w1=w1, b1=b1, w2=w2, b2=b2, w3=w3, b3=b3)


def _prepare_params(params, compute_dtype):
    """Pad only the hidden dims to 128 lanes; input (64) and output (64) stay unpadded."""
    w1, b1 = params["w1"], params["b1"]
    w2, b2 = params["w2"], params["b2"]
    w3, b3 = params["w3"], params["b3"]
    h1, h2 = w1.shape[1], w2.shape[1]
    h1p, h2p = _round_up(h1, LANE), _round_up(h2, LANE)

    w1p = jnp.pad(w1, ((0, 0), (0, h1p - h1))).astype(compute_dtype)
    b1p = jnp.pad(b1, ((0, 0), (0, h1p - h1))).astype(jnp.float32)   # added to f32 acc
    w2p = jnp.pad(w2, ((0, h1p - h1), (0, h2p - h2))).astype(compute_dtype)
    b2p = jnp.pad(b2, ((0, 0), (0, h2p - h2))).astype(jnp.float32)
    w3p = jnp.pad(w3, ((0, h2p - h2), (0, 0))).astype(compute_dtype)
    b3p = b3.astype(jnp.float32)
    return w1p, b1p, w2p, b2p, w3p, b3p


def _choose_tile(b, tile_b):
    """Sublane-aligned batch tile; keep >= 2 grid steps when possible (v7x megacore)."""
    b8 = _round_up(max(b, 1), 8)
    if b8 >= 16:
        half = _round_up((b8 + 1) // 2, 8)
    else:
        half = b8
    tb = min(tile_b, half)
    b_pad = _round_up(b8, tb)
    return tb, b_pad


# ---------------------------------------------------------------------------
# Forward wrapper reproducing the PyTorch forward() glue semantics
# ---------------------------------------------------------------------------
def mlp_forward(seq, params, *, use_bf16=False, tile_b=1024):
    # Matches the PyTorch module's np.squeeze(seq) with no axis (drops batch dim for B==1),
    # then torch.flatten(start_dim=1 if >2-D else start_dim=0).
    x = jnp.squeeze(seq)
    if x.ndim > 2:
        x = x.reshape(x.shape[0], -1)
    else:
        x = x.reshape(-1)
    single = (x.ndim == 1)
    if single:
        x = x[None, :]                       # kernel works on (B, F)

    b = x.shape[0]
    compute_dtype = jnp.bfloat16 if use_bf16 else jnp.float32
    tb, b_pad = _choose_tile(b, tile_b)
    if b_pad != b:
        x = jnp.pad(x, ((0, b_pad - b), (0, 0)))   # small batch remainder only

    w1, b1, w2, b2, w3, b3 = _prepare_params(params, compute_dtype)
    out = _mlp_pallas(x, w1, b1, w2, b2, w3, b3, tb=tb,
                      exact_softmax=not use_bf16)
    if b_pad != b:
        out = out[:b]
    if single:
        out = out[0]
    return out


# ---------------------------------------------------------------------------
# Plain-JAX reference
# ---------------------------------------------------------------------------
def mlp_reference(seq, params):
    x = jnp.squeeze(seq)
    x = x.reshape(x.shape[0], -1) if x.ndim > 2 else x.reshape(-1)
    x = x.astype(jnp.float32)
    h1 = jnp.tanh(x @ params["w1"] + params["b1"][0])
    h2 = jnp.tanh(h1 @ params["w2"] + params["b2"][0])
    logits = h2 @ params["w3"] + params["b3"][0]
    return jax.nn.softmax(logits, axis=-1)


if __name__ == "__main__":
    # conf: board_size=8, nodesFirst=32, nodesSec=32 -> lin1: 64->32, lin2: 32->32, lin3: 32->64
    board_size, nodes_first, nodes_second = 8, 32, 32

    key = jax.random.PRNGKey(0)
    k_params, k_x, k_xl = jax.random.split(key, 3)
    params = init_mlp_params(k_params, board_size, nodes_first, nodes_second)

    # ---- small batch: (B, 1, H, W) NCHW board with singleton channel ----
    x_small = jax.random.normal(k_x, (2, 1, board_size, board_size), jnp.float32)
    out = jax.block_until_ready(mlp_forward(x_small, params))
    ref = mlp_reference(x_small, params)
    assert out.shape == (2, 64), out.shape
    assert jnp.allclose(out, ref, atol=5e-5, rtol=5e-5), "f32 small-batch mismatch"
    assert jnp.allclose(jnp.sum(out, axis=-1), 1.0, atol=1e-5), "softmax rows must sum to 1"

    # ---- larger batch: exercises a multi-step batch grid (tb=256 -> grid=(2,)) ----
    x_large = jax.random.normal(k_xl, (512, 1, board_size, board_size), jnp.float32)
    out_l = jax.block_until_ready(mlp_forward(x_large, params))
    ref_l = mlp_reference(x_large, params)
    assert out_l.shape == (512, 64), out_l.shape
    assert jnp.allclose(out_l, ref_l, atol=5e-5, rtol=5e-5), "f32 large-batch mismatch"
    assert jnp.allclose(jnp.sum(out_l, axis=-1), 1.0, atol=1e-5)

    # ---- bf16-matmul + approx-reciprocal perf path (f32 accumulation & epilogue) ----
    out_bf = jax.block_until_ready(mlp_forward(x_large, params, use_bf16=True))
    assert out_bf.shape == (512, 64), out_bf.shape
    assert jnp.allclose(out_bf, ref_l, atol=2e-2, rtol=2e-2), "bf16 path too far from reference"
    assert jnp.allclose(jnp.sum(out_bf, axis=-1), 1.0, atol=5e-3)

    print("KERNEL_OK")
</pallas_src>

<mosaic_0001>
module attributes {stable_mosaic.version = 11 : i64} {
  func.func @_mlp_kernel(%arg0: i32, %arg1: memref<8x64xf32, #tpu.memory_space<vmem>>, %arg2: memref<64x128xf32, #tpu.memory_space<vmem>>, %arg3: memref<1x128xf32, #tpu.memory_space<vmem>>, %arg4: memref<128x128xf32, #tpu.memory_space<vmem>>, %arg5: memref<1x128xf32, #tpu.memory_space<vmem>>, %arg6: memref<128x64xf32, #tpu.memory_space<vmem>>, %arg7: memref<1x64xf32, #tpu.memory_space<vmem>>, %arg8: memref<8x64xf32, #tpu.memory_space<vmem>>) attributes {dimension_semantics = [#tpu.dimension_semantics<parallel>], iteration_bounds = array<i64: 1>, scalar_prefetch = 0 : i64, scratch_operands = 0 : i64, tpu.core_type = #tpu.core_type<tc>, window_params = [{transform_indices = @transform_0, window_bounds = array<i64: 8, 64>}, {pipeline_mode = #tpu.pipeline_mode<synchronous>, transform_indices = @transform_1, window_bounds = array<i64: 64, 128>}, {pipeline_mode = #tpu.pipeline_mode<synchronous>, transform_indices = @transform_2, window_bounds = array<i64: 1, 128>}, {pipeline_mode = #tpu.pipeline_mode<synchronous>, transform_indices = @transform_3, window_bounds = array<i64: 128, 128>}, {pipeline_mode = #tpu.pipeline_mode<synchronous>, transform_indices = @transform_4, window_bounds = array<i64: 1, 128>}, {pipeline_mode = #tpu.pipeline_mode<synchronous>, transform_indices = @transform_5, window_bounds = array<i64: 128, 64>}, {pipeline_mode = #tpu.pipeline_mode<synchronous>, transform_indices = @transform_6, window_bounds = array<i64: 1, 64>}, {transform_indices = @transform_7, window_bounds = array<i64: 8, 64>}]} {
    %c0 = arith.constant 0 : index
    %c0_0 = arith.constant 0 : index
    %0 = vector.load %arg2[%c0, %c0_0] : memref<64x128xf32, #tpu.memory_space<vmem>>, vector<64x128xf32>
    %c0_1 = arith.constant 0 : index
    %c0_2 = arith.constant 0 : index
    %1 = vector.load %arg1[%c0_1, %c0_2] : memref<8x64xf32, #tpu.memory_space<vmem>>, vector<8x64xf32>
    %cst = arith.constant dense<0.000000e+00> : vector<8x128xf32>
    %2 = tpu.matmul %1, %0, %cst {dimension_numbers = #tpu.dot_dimension_numbers<[1], [0], [0], [1], [0, 0, 1, 1], [], []>} : vector<8x64xf32>, vector<64x128xf32>, vector<8x128xf32> -> vector<8x128xf32>
    %c0_3 = arith.constant 0 : index
    %c0_4 = arith.constant 0 : index
    %3 = vector.load %arg3[%c0_3, %c0_4] : memref<1x128xf32, #tpu.memory_space<vmem>>, vector<1x128xf32>
    %4 = vector.broadcast %3 : vector<1x128xf32> to vector<8x128xf32>
    %5 = arith.addf %2, %4 : vector<8x128xf32>
    %6 = math.tanh %5 : vector<8x128xf32>
    %c0_5 = arith.constant 0 : index
    %c0_6 = arith.constant 0 : index
    %7 = vector.load %arg4[%c0_5, %c0_6] : memref<128x128xf32, #tpu.memory_space<vmem>>, vector<128x128xf32>
    %cst_7 = arith.constant dense<0.000000e+00> : vector<8x128xf32>
    %8 = tpu.matmul %6, %7, %cst_7 {dimension_numbers = #tpu.dot_dimension_numbers<[1], [0], [0], [1], [0, 0, 1, 1], [], []>} : vector<8x128xf32>, vector<128x128xf32>, vector<8x128xf32> -> vector<8x128xf32>
    %c0_8 = arith.constant 0 : index
    %c0_9 = arith.constant 0 : index
    %9 = vector.load %arg5[%c0_8, %c0_9] : memref<1x128xf32, #tpu.memory_space<vmem>>, vector<1x128xf32>
    %10 = vector.broadcast %9 : vector<1x128xf32> to vector<8x128xf32>
    %11 = arith.addf %8, %10 : vector<8x128xf32>
    %12 = math.tanh %11 : vector<8x128xf32>
    %c0_10 = arith.constant 0 : index
    %c0_11 = arith.constant 0 : index
    %13 = vector.load %arg6[%c0_10, %c0_11] : memref<128x64xf32, #tpu.memory_space<vmem>>, vector<128x64xf32>
    %cst_12 = arith.constant dense<0.000000e+00> : vector<8x64xf32>
    %14 = tpu.matmul %12, %13, %cst_12 {dimension_numbers = #tpu.dot_dimension_numbers<[1], [0], [0], [1], [0, 0, 1, 1], [], []>} : vector<8x128xf32>, vector<128x64xf32>, vector<8x64xf32> -> vector<8x64xf32>
    %c0_13 = arith.constant 0 : index
    %c0_14 = arith.constant 0 : index
    %15 = vector.load %arg7[%c0_13, %c0_14] : memref<1x64xf32, #tpu.memory_space<vmem>>, vector<1x64xf32>
    %16 = vector.broadcast %15 : vector<1x64xf32> to vector<8x64xf32>
    %17 = arith.addf %14, %16 : vector<8x64xf32>
    %cst_15 = arith.constant dense<0xFF800000> : vector<8xf32>
    %18 = vector.multi_reduction <maximumf>, %17, %cst_15 [1] : vector<8x64xf32> to vector<8xf32>
    %19 = vector.shape_cast %18 : vector<8xf32> to vector<8x1xf32>
    %20 = vector.broadcast %19 : vector<8x1xf32> to vector<8x64xf32>
    %21 = arith.subf %17, %20 : vector<8x64xf32>
    %22 = math.exp %21 : vector<8x64xf32>
    %cst_16 = arith.constant dense<0.000000e+00> : vector<8xf32>
    %23 = vector.multi_reduction <add>, %22, %cst_16 [1] : vector<8x64xf32> to vector<8xf32>
    %24 = vector.shape_cast %23 : vector<8xf32> to vector<8x1xf32>
    %25 = vector.broadcast %24 : vector<8x1xf32> to vector<8x64xf32>
    %26 = arith.divf %22, %25 : vector<8x64xf32>
    %c0_17 = arith.constant 0 : index
    %c0_18 = arith.constant 0 : index
    %27 = vector.load %arg8[%c0_17, %c0_18] : memref<8x64xf32, #tpu.memory_space<vmem>>, vector<8x64xf32>
    tpu.vector_store %arg8[%c0_17, %c0_18], %26 {strides = array<i32>} : memref<8x64xf32, #tpu.memory_space<vmem>>, vector<8x64xf32>,
    return
  }
  func.func @transform_0(%arg0: i32) -> (i32, i32) {
    %c0_i32 = arith.constant 0 : i32
    %c0_i32_0 = arith.constant 0 : i32
    return %arg0, %c0_i32 : i32, i32
  }
  func.func @transform_1(%arg0: i32) -> (i32, i32) {
    %c0_i32 = arith.constant 0 : i32
    %c0_i32_0 = arith.constant 0 : i32
    %c0_i32_1 = arith.constant 0 : i32
    return %c0_i32, %c0_i32_0 : i32, i32
  }
  func.func @transform_2(%arg0: i32) -> (i32, i32) {
    %c0_i32 = arith.constant 0 : i32
    %c0_i32_0 = arith.constant 0 : i32
    %c0_i32_1 = arith.constant 0 : i32
    return %c0_i32, %c0_i32_0 : i32, i32
  }
  func.func @transform_3(%arg0: i32) -> (i32, i32) {
    %c0_i32 = arith.constant 0 : i32
    %c0_i32_0 = arith.constant 0 : i32
    %c0_i32_1 = arith.constant 0 : i32
    return %c0_i32, %c0_i32_0 : i32, i32
  }
  func.func @transform_4(%arg0: i32) -> (i32, i32) {
    %c0_i32 = arith.constant 0 : i32
    %c0_i32_0 = arith.constant 0 : i32
    %c0_i32_1 = arith.constant 0 : i32
    return %c0_i32, %c0_i32_0 : i32, i32
  }
  func.func @transform_5(%arg0: i32) -> (i32, i32) {
    %c0_i32 = arith.constant 0 : i32
    %c0_i32_0 = arith.constant 0 : i32
    %c0_i32_1 = arith.constant 0 : i32
    return %c0_i32, %c0_i32_0 : i32, i32
  }
  func.func @transform_6(%arg0: i32) -> (i32, i32) {
    %c0_i32 = arith.constant 0 : i32
    %c0_i32_0 = arith.constant 0 : i32
    %c0_i32_1 = arith.constant 0 : i32
    return %c0_i32, %c0_i32_0 : i32, i32
  }
  func.func @transform_7(%arg0: i32) -> (i32, i32) {
    %c0_i32 = arith.constant 0 : i32
    %c0_i32_0 = arith.constant 0 : i32
    return %arg0, %c0_i32 : i32, i32
  }
}

</mosaic_0001>

<llo_original>
// kernel: tpu_custom_call.1
$region0: #{tpu_custom_call.1}
  #allocation0 [shape = 'u32[]', space=smem, size = 0x4, offset = 0x4, fixed_abs, tag = 'smem constant byte address 0x4 - core index']
  #allocation1 [shape = 'u32[144,128]{1,0:T(1,128)}', space=vmem, size = 0x12000, scoped, tag = 'internal scratch']
  %s0 = inlined_call_operand.vmem [shape: f32[8,64], index: 0, kind: input, shape index: {}]
  %s1 = inlined_call_operand.vmem [shape: f32[64,128], index: 1, kind: input, shape index: {}]
  %s2 = inlined_call_operand.vmem [shape: f32[1,128], index: 2, kind: input, shape index: {}]
  %s3 = inlined_call_operand.vmem [shape: f32[128,128], index: 3, kind: input, shape index: {}]
  %s4 = inlined_call_operand.vmem [shape: f32[1,128], index: 4, kind: input, shape index: {}]
  %s5 = inlined_call_operand.vmem [shape: f32[128,64], index: 5, kind: input, shape index: {}]
  %s6 = inlined_call_operand.vmem [shape: f32[1,64], index: 6, kind: input, shape index: {}]
  %s7 = inlined_call_operand.hbm [shape: f32[8,64], index: 7, kind: output, shape index: {}]
  %s8 = sld [smem:[#allocation0]]
  $region38: #{tpu_custom_call.1} parent=0
    _
  %s10 = ssub.s32 1, %s8
  %s11 = scalar_select 0, %s10, %s8
  $region1: #{tpu_custom_call.1} parent=0
    #allocation2 [shape = 'u8[4096]{0}', space=vmem, size = 0x1000, scoped, tag = 'output window, operand 0, single buffered']
    #allocation3 [shape = 's32[1]{0}', space=sflag, size = 0x4, scoped, tag = 'scoped memory for tpu_custom_call.1']
    %12 = vsyncpa [#allocation3], 0
    // Predicated region
    $region2: #{tpu_custom_call.1} parent=1 // pred_check
      _
    $region3: #{tpu_custom_call.1} parent=1 // pred_check_branch
      %14 = sbr.rel (0) target = $region5
    $region4: #{tpu_custom_call.1} parent=1 // pred_region
      _
    $region5: #{tpu_custom_call.1} parent=1 // pred_fallthru
      _
    // Predicated region
    $region6: #{tpu_custom_call.1} parent=1 // pred_check
      _
    $region7: #{tpu_custom_call.1} parent=1 // pred_check_branch
      %16 = sbr.rel (0) target = $region9
    $region8: #{tpu_custom_call.1} parent=1 // pred_region
      _
    $region9: #{tpu_custom_call.1} parent=1 // pred_fallthru
      _
    // Predicated region
    $region10: #{tpu_custom_call.1} parent=1 // pred_check
      _
    $region11: #{tpu_custom_call.1} parent=1 // pred_check_branch
      %18 = sbr.rel (0) target = $region13
    $region12: #{tpu_custom_call.1} parent=1 // pred_region
      _
    $region13: #{tpu_custom_call.1} parent=1 // pred_fallthru
      _
    // Predicated region
    $region14: #{tpu_custom_call.1} parent=1 // pred_check
      _
    $region15: #{tpu_custom_call.1} parent=1 // pred_check_branch
      %20 = sbr.rel (0) target = $region17
    $region16: #{tpu_custom_call.1} parent=1 // pred_region
      _
    $region17: #{tpu_custom_call.1} parent=1 // pred_fallthru
      _
    // Predicated region
    $region18: #{tpu_custom_call.1} parent=1 // pred_check
      _
    $region19: #{tpu_custom_call.1} parent=1 // pred_check_branch
      %22 = sbr.rel (0) target = $region21
    $region20: #{tpu_custom_call.1} parent=1 // pred_region
      _
    $region21: #{tpu_custom_call.1} parent=1 // pred_fallthru
      _
    // Predicated region
    $region22: #{tpu_custom_call.1} parent=1 // pred_check
      _
    $region23: #{tpu_custom_call.1} parent=1 // pred_check_branch
      %24 = sbr.rel (0) target = $region25
    $region24: #{tpu_custom_call.1} parent=1 // pred_region
      _
    $region25: #{tpu_custom_call.1} parent=1 // pred_fallthru
      _
    // Predicated region
    $region26: #{tpu_custom_call.1} parent=1 // pred_check
      _
    $region27: #{tpu_custom_call.1} parent=1 // pred_check_branch
      %26 = sbr.rel (0) target = $region29
    $region28: #{tpu_custom_call.1} parent=1 // pred_region
      _
    $region29: #{tpu_custom_call.1} parent=1 // pred_fallthru
      _
    %v27 = vld [vmem:[%s1] sm:$0xff]
    %v28 = vld [vmem:[%s1 + $0x8] sm:$0xff]
    %v29 = vld [vmem:[%s1 + $0x10] sm:$0xff]
    %v30 = vld [vmem:[%s1 + $0x18] sm:$0xff]
    %v31 = vld [vmem:[%s1 + $0x20] sm:$0xff]
    %v32 = vld [vmem:[%s1 + $0x28] sm:$0xff]
    %v33 = vld [vmem:[%s1 + $0x30] sm:$0xff]
    %v34 = vld [vmem:[%s1 + $0x38] sm:$0xff]
    %v35 = vld [vmem:[%s0] sm:$0xff]
    %v36 = vld [vmem:[%s2] sm:$0x1]
    %v38 = vlaneseq
    %v39 = vshrl.u32 %v38, 7
    %v40 = vsub.s32 0, %v39
    %v41 = vrot.slane %v36, %v40
    %vm43 = vcmask 523264
    %v45 = vsel %vm43, %v35, 0
    %47 = vmatprep.subr.mxu0 0.0
    %48 = vmatpush1.msra.mxu0 %v27
    %49 = vmatprep.subr.mxu0 0.0
    %50 = vmatpush1.msra.mxu0 %v28
    %51 = vmatprep.subr.mxu0 0.0
    %52 = vmatpush1.msra.mxu0 %v29
    %53 = vmatprep.subr.mxu0 0.0
    %54 = vmatpush1.msra.mxu0 %v30
    %55 = vmatprep.subr.mxu0 0.0
    %56 = vmatpush1.msra.mxu0 %v31
    %57 = vmatprep.subr.mxu0 0.0
    %58 = vmatpush1.msra.mxu0 %v32
    %59 = vmatprep.subr.mxu0 0.0
    %60 = vmatpush1.msra.mxu0 %v33
    %61 = vmatprep.subr.mxu0 0.0
    %62 = vmatpush1.msra.mxu0 %v34
    %63 = vmatprep.subr.mxu0 0.0
    %64 = vmatpush1.msra.mxu0 0.0
    %65 = vmatprep.subr.mxu0 0.0
    %66 = vmatpush1.msra.mxu0 0.0
    %67 = vmatprep.subr.mxu0 0.0
    %68 = vmatpush1.msra.mxu0 0.0
    %69 = vmatprep.subr.mxu0 0.0
    %70 = vmatpush1.msra.mxu0 0.0
    %71 = vmatprep.subr.mxu0 0.0
    %72 = vmatpush1.msra.mxu0 0.0
    %73 = vmatprep.subr.mxu0 0.0
    %74 = vmatpush1.msra.mxu0 0.0
    %75 = vmatprep.subr.mxu0 0.0
    %76 = vmatpush1.msra.mxu0 0.0
    %77 = vmatprep.subr.mxu0 0.0
    %78 = vmatpush1.msra.mxu0 0.0
    %79 = vmatprep.subr.mxu0 0.0
    %80 = vmatpush1.msra.mxu0 0.0
    %81 = vmatprep.subr.mxu0 0.0
    %82 = vmatpush1.msra.mxu0 0.0
    %83 = vmatprep.subr.mxu0 0.0
    %84 = vmatpush1.msra.mxu0 0.0
    %85 = vmatprep.subr.mxu0 0.0
    %86 = vmatpush1.msra.mxu0 0.0
    %87 = vmatprep.subr.mxu0 0.0
    %88 = vmatpush1.msra.mxu0 0.0
    %89 = vmatprep.subr.mxu0 0.0
    %90 = vmatpush1.msra.mxu0 0.0
    %91 = vmatprep.subr.mxu0 0.0
    %92 = vmatpush1.msra.mxu0 0.0
    %93 = vmatprep.subr.mxu0 0.0
    %94 = vmatpush1.msra.mxu0 0.0
    %95 = vmatprep.subr.mxu0 0.0
    %96 = vmatpush1.msra.mxu0 0.0
    %97 = vmatprep.subr.mxu0 0.0
    %98 = vmatpush1.msra.mxu0 0.0
    %99 = vmatprep.subr.mxu0 0.0
    %100 = vmatpush1.msra.mxu0 0.0
    %101 = vmatprep.subr.mxu0 0.0
    %102 = vmatpush1.msra.mxu0 0.0
    %103 = vmatprep.subr.mxu0 0.0
    %104 = vmatpush1.msra.mxu0 0.0
    %105 = vmatprep.subr.mxu0 0.0
    %106 = vmatpush1.msra.mxu0 0.0
    %107 = vmatprep.subr.mxu0 0.0
    %108 = vmatpush1.msra.mxu0 0.0
    %109 = vmatprep.subr.mxu0 0.0
    %110 = vmatpush1.msra.mxu0 0.0
    %111 = vmatprep.mubr.f32.mxu0 0.0
    %112 = vmatmul.mubr.f32.gmra.mrb[0].mxu0 %v45
    %v113 = vpop.f32.mrb[0].mxu0
    %v114 = vadd.f32 %v41, %v113
    %v115 = vpop.f32.mrb[0].mxu0
    %116 = vdwg.mxu0
    %v117 = vtanh.pop %v114
    %v118 = vld [vmem:[%s3] sm:$0xff]
    %v119 = vld [vmem:[%s3 + $0x8] sm:$0xff]
    %v120 = vld [vmem:[%s3 + $0x10] sm:$0xff]
    %v121 = vld [vmem:[%s3 + $0x18] sm:$0xff]
    %v122 = vld [vmem:[%s3 + $0x20] sm:$0xff]
    %v123 = vld [vmem:[%s3 + $0x28] sm:$0xff]
    %v124 = vld [vmem:[%s3 + $0x30] sm:$0xff]
    %v125 = vld [vmem:[%s3 + $0x38] sm:$0xff]
    %v126 = vld [vmem:[%s3 + $0x40] sm:$0xff]
    %v127 = vld [vmem:[%s3 + $0x48] sm:$0xff]
    %v128 = vld [vmem:[%s3 + $0x50] sm:$0xff]
    %v129 = vld [vmem:[%s3 + $0x58] sm:$0xff]
    %v130 = vld [vmem:[%s3 + $0x60] sm:$0xff]
    %v131 = vld [vmem:[%s3 + $0x68] sm:$0xff]
    %v132 = vld [vmem:[%s3 + $0x70] sm:$0xff]
    %v133 = vld [vmem:[%s3 + $0x78] sm:$0xff]
    %v134 = vld [vmem:[%s4] sm:$0x1]
    %v136 = vlaneseq
    %v137 = vshrl.u32 %v136, 7
    %v138 = vsub.s32 0, %v137
    %v139 = vrot.slane %v134, %v138
    %141 = vmatprep.subr.mxu0 0.0
    %142 = vmatpush1.msra.mxu0 %v118
    %143 = vmatprep.subr.mxu0 0.0
    %144 = vmatpush1.msra.mxu0 %v119
    %145 = vmatprep.subr.mxu0 0.0
    %146 = vmatpush1.msra.mxu0 %v120
    %147 = vmatprep.subr.mxu0 0.0
    %148 = vmatpush1.msra.mxu0 %v121
    %149 = vmatprep.subr.mxu0 0.0
    %150 = vmatpush1.msra.mxu0 %v122
    %151 = vmatprep.subr.mxu0 0.0
    %152 = vmatpush1.msra.mxu0 %v123
    %153 = vmatprep.subr.mxu0 0.0
    %154 = vmatpush1.msra.mxu0 %v124
    %155 = vmatprep.subr.mxu0 0.0
    %156 = vmatpush1.msra.mxu0 %v125
    %157 = vmatprep.subr.mxu0 0.0
    %158 = vmatpush1.msra.mxu0 %v126
    %159 = vmatprep.subr.mxu0 0.0
    %160 = vmatpush1.msra.mxu0 %v127
    %161 = vmatprep.subr.mxu0 0.0
    %162 = vmatpush1.msra.mxu0 %v128
    %163 = vmatprep.subr.mxu0 0.0
    %164 = vmatpush1.msra.mxu0 %v129
    %165 = vmatprep.subr.mxu0 0.0
    %166 = vmatpush1.msra.mxu0 %v130
    %167 = vmatprep.subr.mxu0 0.0
    %168 = vmatpush1.msra.mxu0 %v131
    %169 = vmatprep.subr.mxu0 0.0
    %170 = vmatpush1.msra.mxu0 %v132
    %171 = vmatprep.subr.mxu0 0.0
    %172 = vmatpush1.msra.mxu0 %v133
    %173 = vmatprep.subr.mxu0 0.0
    %174 = vmatpush1.msra.mxu0 0.0
    %175 = vmatprep.subr.mxu0 0.0
    %176 = vmatpush1.msra.mxu0 0.0
    %177 = vmatprep.subr.mxu0 0.0
    %178 = vmatpush1.msra.mxu0 0.0
    %179 = vmatprep.subr.mxu0 0.0
    %180 = vmatpush1.msra.mxu0 0.0
    %181 = vmatprep.subr.mxu0 0.0
    %182 = vmatpush1.msra.mxu0 0.0
    %183 = vmatprep.subr.mxu0 0.0
    %184 = vmatpush1.msra.mxu0 0.0
    %185 = vmatprep.subr.mxu0 0.0
    %186 = vmatpush1.msra.mxu0 0.0
    %187 = vmatprep.subr.mxu0 0.0
    %188 = vmatpush1.msra.mxu0 0.0
    %189 = vmatprep.subr.mxu0 0.0
    %190 = vmatpush1.msra.mxu0 0.0
    %191 = vmatprep.subr.mxu0 0.0
    %192 = vmatpush1.msra.mxu0 0.0
    %193 = vmatprep.subr.mxu0 0.0
    %194 = vmatpush1.msra.mxu0 0.0
    %195 = vmatprep.subr.mxu0 0.0
    %196 = vmatpush1.msra.mxu0 0.0
    %197 = vmatprep.subr.mxu0 0.0
    %198 = vmatpush1.msra.mxu0 0.0
    %199 = vmatprep.subr.mxu0 0.0
    %200 = vmatpush1.msra.mxu0 0.0
    %201 = vmatprep.subr.mxu0 0.0
    %202 = vmatpush1.msra.mxu0 0.0
    %203 = vmatprep.subr.mxu0 0.0
    %204 = vmatpush1.msra.mxu0 0.0
    %205 = vmatprep.mubr.f32.mxu0 0.0
    %206 = vmatmul.mubr.f32.gmra.mrb[0].mxu0 %v117
    %v207 = vpop.f32.mrb[0].mxu0
    %v208 = vadd.f32 %v139, %v207
    %v209 = vpop.f32.mrb[0].mxu0
    %210 = vdwg.mxu0
    %v211 = vtanh.pop %v208
    %v212 = vld [vmem:[%s5] sm:$0xff]
    %v213 = vld [vmem:[%s5 + $0x8] sm:$0xff]
    %v214 = vld [vmem:[%s5 + $0x10] sm:$0xff]
    %v215 = vld [vmem:[%s5 + $0x18] sm:$0xff]
    %v216 = vld [vmem:[%s5 + $0x20] sm:$0xff]
    %v217 = vld [vmem:[%s5 + $0x28] sm:$0xff]
    %v218 = vld [vmem:[%s5 + $0x30] sm:$0xff]
    %v219 = vld [vmem:[%s5 + $0x38] sm:$0xff]
    %v220 = vld [vmem:[%s5 + $0x40] sm:$0xff]
    %v221 = vld [vmem:[%s5 + $0x48] sm:$0xff]
    %v222 = vld [vmem:[%s5 + $0x50] sm:$0xff]
    %v223 = vld [vmem:[%s5 + $0x58] sm:$0xff]
    %v224 = vld [vmem:[%s5 + $0x60] sm:$0xff]
    %v225 = vld [vmem:[%s5 + $0x68] sm:$0xff]
    %v226 = vld [vmem:[%s5 + $0x70] sm:$0xff]
    %v227 = vld [vmem:[%s5 + $0x78] sm:$0xff]
    %v228 = vld [vmem:[%s6] sm:$0x1]
    %v230 = vlaneseq
    %v231 = vshrl.u32 %v230, 7
    %v232 = vsub.s32 0, %v231
    %v233 = vrot.slane %v228, %v232
    %235 = vmatprep.subr.mxu0 0.0
    %236 = vmatpush1.msra.mxu0 %v212
    %237 = vmatprep.subr.mxu0 0.0
    %238 = vmatpush1.msra.mxu0 %v213
    %239 = vmatprep.subr.mxu0 0.0
    %240 = vmatpush1.msra.mxu0 %v214
    %241 = vmatprep.subr.mxu0 0.0
    %242 = vmatpush1.msra.mxu0 %v215
    %243 = vmatprep.subr.mxu0 0.0
    %244 = vmatpush1.msra.mxu0 %v216
    %245 = vmatprep.subr.mxu0 0.0
    %246 = vmatpush1.msra.mxu0 %v217
    %247 = vmatprep.subr.mxu0 0.0
    %248 = vmatpush1.msra.mxu0 %v218
    %249 = vmatprep.subr.mxu0 0.0
    %250 = vmatpush1.msra.mxu0 %v219
    %251 = vmatprep.subr.mxu0 0.0
    %252 = vmatpush1.msra.mxu0 %v220
    %253 = vmatprep.subr.mxu0 0.0
    %254 = vmatpush1.msra.mxu0 %v221
    %255 = vmatprep.subr.mxu0 0.0
    %256 = vmatpush1.msra.mxu0 %v222
    %257 = vmatprep.subr.mxu0 0.0
    %258 = vmatpush1.msra.mxu0 %v223
    %259 = vmatprep.subr.mxu0 0.0
    %260 = vmatpush1.msra.mxu0 %v224
    %261 = vmatprep.subr.mxu0 0.0
    %262 = vmatpush1.msra.mxu0 %v225
    %263 = vmatprep.subr.mxu0 0.0
    %264 = vmatpush1.msra.mxu0 %v226
    %265 = vmatprep.subr.mxu0 0.0
    %266 = vmatpush1.msra.mxu0 %v227
    %267 = vmatprep.subr.mxu0 0.0
    %268 = vmatpush1.msra.mxu0 0.0
    %269 = vmatprep.subr.mxu0 0.0
    %270 = vmatpush1.msra.mxu0 0.0
    %271 = vmatprep.subr.mxu0 0.0
    %272 = vmatpush1.msra.mxu0 0.0
    %273 = vmatprep.subr.mxu0 0.0
    %274 = vmatpush1.msra.mxu0 0.0
    %275 = vmatprep.subr.mxu0 0.0
    %276 = vmatpush1.msra.mxu0 0.0
    %277 = vmatprep.subr.mxu0 0.0
    %278 = vmatpush1.msra.mxu0 0.0
    %279 = vmatprep.subr.mxu0 0.0
    %280 = vmatpush1.msra.mxu0 0.0
    %281 = vmatprep.subr.mxu0 0.0
    %282 = vmatpush1.msra.mxu0 0.0
    %283 = vmatprep.subr.mxu0 0.0
    %284 = vmatpush1.msra.mxu0 0.0
    %285 = vmatprep.subr.mxu0 0.0
    %286 = vmatpush1.msra.mxu0 0.0
    %287 = vmatprep.subr.mxu0 0.0
    %288 = vmatpush1.msra.mxu0 0.0
    %289 = vmatprep.subr.mxu0 0.0
    %290 = vmatpush1.msra.mxu0 0.0
    %291 = vmatprep.subr.mxu0 0.0
    %292 = vmatpush1.msra.mxu0 0.0
    %293 = vmatprep.subr.mxu0 0.0
    %294 = vmatpush1.msra.mxu0 0.0
    %295 = vmatprep.subr.mxu0 0.0
    %296 = vmatpush1.msra.mxu0 0.0
    %297 = vmatprep.subr.mxu0 0.0
    %298 = vmatpush1.msra.mxu0 0.0
    %299 = vmatprep.mubr.f32.mxu0 0.0
    %300 = vmatmul.mubr.f32.gmra.mrb[0].mxu0 %v211
    %v301 = vpop.f32.mrb[0].mxu0
    %v302 = vadd.f32 %v233, %v301
    %v303 = vpop.f32.mrb[0].mxu0
    %304 = vdwg.mxu0
    %v305 = vsel %vm43, %v302, -inf
    %306 = vmax.xlane.f32.xlu0 %v305
    %v307 = vpop.xlane.xlu0 %306
    %v308 = vsub.f32 %v302, %v307
    %v309 = vmul.f32 %v308, 1.442695
    %v310 = vpow.pop %v309
    %v311 = vsel %vm43, %v310, 0.0
    %312 = vadd.xlane.f32.xlu0 %v311
    %v313 = vpop.xlane.xlu0 %312
    %v314 = vrcp.pop %v313
    %v315 = vmul.f32 %v310, %v314
    %316 = vst.msk [vmem:[#allocation2] sm:$0xff] %vm43, %v315
    // Predicated region
    $region30: #{tpu_custom_call.1} parent=1 // pred_check
      _
    $region31: #{tpu_custom_call.1} parent=1 // pred_check_branch
      %318 = sbr.rel (0) target = $region33
    $region32: #{tpu_custom_call.1} parent=1 // pred_region
      %s320 = ssub.s32 128, 128
      %321 = vsyncadd [#allocation3], %s320
      %s323 = sshll.u32 [#allocation2], 4
      %s324 = int_to_ptr.vmem [resolvable:$true] %s323
      %326 = dma.vmem_to_hbm [thread:$0]  %s324, 128, %s7, [#allocation3]
    $region33: #{tpu_custom_call.1} parent=1 // pred_fallthru
      _
    // Predicated region
    $region34: #{tpu_custom_call.1} parent=1 // pred_check
      _
    $region35: #{tpu_custom_call.1} parent=1 // pred_check_branch
      %328 = sbr.rel (0) target = $region37
    $region36: #{tpu_custom_call.1} parent=1 // pred_region
      %329 = dma.done [#allocation3], 128
    $region37: #{tpu_custom_call.1} parent=1 // pred_fallthru
      _
    %330 = vsyncpa [#allocation3], 1

</llo_original>
